<compile_context>
chip_gen: v7x
topology: tpu7x:2x2x1
jax: 0.10.0
libtpu: 0.0.40
codegen_flags: <defaults>
</compile_context>

<pallas_src>
import jax
import jax.numpy as jnp
from jax.experimental import pallas as pl
from jax.experimental.pallas import tpu as pltpu

LANE = 128  # TPU vreg lane width; feature dims are padded to multiples of this.


def _round_up(n, m):
    return ((n + m - 1) // m) * m


def _pad2d(a, rows, cols):
    return jnp.pad(a, ((0, rows - a.shape[0]), (0, cols - a.shape[1])))


def _bgrl_fused_kernel(
        x1_ref, x2_ref,
        ow1_ref, ob1_ref, ow2_ref, ob2_ref,      # online encoder
        tw1_ref, tb1_ref, tw2_ref, tb2_ref,      # target encoder
        pw1_ref, pb1_ref, pw2_ref, pb2_ref,      # predictor
        target_ref, pred_ref):
    """target = target_enc(x2); pred = predictor(online_enc(x1)).

    Weights/activations are bf16 (MXU inputs), accumulation + bias + ReLU in
    f32. The online representation stays in VMEM/vregs across the chain.
    """

    def mlp2(x, w1_ref, b1_ref, w2_ref, b2_ref):
        h = jnp.dot(x, w1_ref[...], preferred_element_type=jnp.float32)
        h = jnp.maximum(h + b1_ref[...], 0.0)
        y = jnp.dot(h.astype(w2_ref.dtype), w2_ref[...],
                    preferred_element_type=jnp.float32)
        return y + b2_ref[...]

    # Target branch (x2).
    target_ref[...] = mlp2(x2_ref[...], tw1_ref, tb1_ref, tw2_ref,
                           tb2_ref).astype(target_ref.dtype)
    # Online encoder -> predictor chain (x1); intermediate never hits HBM.
    online = mlp2(x1_ref[...], ow1_ref, ob1_ref, ow2_ref, ob2_ref)
    pred_ref[...] = mlp2(online.astype(pw1_ref.dtype), pw1_ref, pb1_ref,
                         pw2_ref, pb2_ref).astype(pred_ref.dtype)


def bgrl_forward(x1, x2, online_params, target_params, predictor_params,
                 *, tile_n=512, compute_dtype=jnp.bfloat16):
    """Fused BGRL forward. Returns (target_representation, prediction)."""
    n, f_in = x1.shape
    f_hid = online_params[0].shape[1]
    f_out = online_params[2].shape[1]

    fin_p = _round_up(f_in, LANE)
    fhid_p = _round_up(f_hid, LANE)
    fout_p = _round_up(f_out, LANE)

    # Row tile: multiple of 8 (sublane), capped at 512 rows (fits v7x 64 MiB
    # VMEM comfortably with double-buffered x/out + resident weights).
    tile_n = _round_up(min(tile_n, _round_up(n, 8)), 8)
    n_p = _round_up(n, tile_n)
    grid = (n_p // tile_n,)

    x1p = _pad2d(x1, n_p, fin_p).astype(compute_dtype)
    x2p = _pad2d(x2, n_p, fin_p).astype(compute_dtype)

    def pad_mlp(params, in_p, hid_p, out_p):
        w1, b1, w2, b2 = params
        return (_pad2d(w1, in_p, hid_p).astype(compute_dtype),
                _pad2d(b1, 1, hid_p).astype(jnp.float32),
                _pad2d(w2, hid_p, out_p).astype(compute_dtype),
                _pad2d(b2, 1, out_p).astype(jnp.float32))

    ow = pad_mlp(online_params, fin_p, fhid_p, fout_p)
    tw = pad_mlp(target_params, fin_p, fhid_p, fout_p)
    pw = pad_mlp(predictor_params, fout_p, fhid_p, fout_p)

    row_in_spec = pl.BlockSpec((tile_n, fin_p), lambda i: (i, 0))
    row_out_spec = pl.BlockSpec((tile_n, fout_p), lambda i: (i, 0))

    def resident_spec(arr):
        # Weights / biases: same block for every row tile -> loaded once,
        # VMEM-resident across the whole grid.
        return pl.BlockSpec(arr.shape, lambda i: (0, 0))

    in_specs = [row_in_spec, row_in_spec]
    for params in (ow, tw, pw):
        in_specs.extend(resident_spec(p) for p in params)

    target, pred = pl.pallas_call(
        _bgrl_fused_kernel,
        out_shape=(jax.ShapeDtypeStruct((n_p, fout_p), jnp.float32),
                   jax.ShapeDtypeStruct((n_p, fout_p), jnp.float32)),
        grid=grid,
        in_specs=in_specs,
        out_specs=(row_out_spec, row_out_spec),
        compiler_params=pltpu.CompilerParams(
            dimension_semantics=("parallel",),          # megacore / v7x 2-TC
            vmem_limit_bytes=48 * 1024 * 1024),         # safe on v5e/v6e/v7x
    )(x1p, x2p, *ow, *tw, *pw)

    return target[:n, :f_out], pred[:n, :f_out]


def init_mlp_params(key, in_dim, hid_dim, out_dim):
    k1, k2 = jax.random.split(key)
    s1 = (2.0 / (in_dim + hid_dim)) ** 0.5
    s2 = (2.0 / (hid_dim + out_dim)) ** 0.5
    w1 = jax.random.normal(k1, (in_dim, hid_dim), jnp.float32) * s1
    b1 = jnp.zeros((1, hid_dim), jnp.float32)
    w2 = jax.random.normal(k2, (hid_dim, out_dim), jnp.float32) * s2
    b2 = jnp.zeros((1, out_dim), jnp.float32)
    return (w1, b1, w2, b2)


class BGRL:
    """JAX/Pallas port of the PyTorch BGRL module (forward pass)."""

    def __init__(self, encoder_params, predictor_params):
        self.online_encoder = tuple(encoder_params)
        self.predictor = tuple(predictor_params)
        # clone_encoder: deep copy with gradients disabled (stop_gradient is
        # applied in forward; "requires_grad=False" has no JAX array analogue).
        self.target_encoder = tuple(jnp.array(p) for p in encoder_params)

    def forward(self, x1, x2):
        target_params = tuple(jax.lax.stop_gradient(p)
                              for p in self.target_encoder)
        target, pred = bgrl_forward(x1, x2, self.online_encoder,
                                    target_params, self.predictor)
        return jax.lax.stop_gradient(target), pred

    def exp_moving_avg(self, decay_rate=0.99):
        self.target_encoder = tuple(
            decay_rate * phi + (1.0 - decay_rate) * theta
            for phi, theta in zip(self.target_encoder, self.online_encoder))

    def get_trained_encoder(self):
        return tuple(jnp.array(p) for p in self.online_encoder)


def _mlp2_ref(x, w1, b1, w2, b2, compute_dtype=jnp.bfloat16):
    """Pure-JAX reference matching the kernel's bf16-matmul / f32-accum math."""
    xc = x.astype(compute_dtype)
    h = jnp.dot(xc, w1.astype(compute_dtype),
                preferred_element_type=jnp.float32) + b1
    h = jnp.maximum(h, 0.0)
    y = jnp.dot(h.astype(compute_dtype), w2.astype(compute_dtype),
                preferred_element_type=jnp.float32) + b2
    return y


if __name__ == "__main__":
    # Small deterministic shapes: 8 nodes, 32 input feats, 64 hidden, 16 latent.
    N, F_IN, F_HID, F_OUT = 8, 32, 64, 16
    key = jax.random.PRNGKey(0)
    k_x1, k_x2, k_enc, k_pred = jax.random.split(key, 4)

    x1 = jax.random.normal(k_x1, (N, F_IN), jnp.float32)
    x2 = jax.random.normal(k_x2, (N, F_IN), jnp.float32)

    enc_params = init_mlp_params(k_enc, F_IN, F_HID, F_OUT)
    # predictor maps latent -> latent (standard BGRL predictor)
    pred_params = init_mlp_params(k_pred, F_OUT, F_HID, F_OUT)

    model = BGRL(enc_params, pred_params)
    target_repr, prediction = model.forward(x1, x2)
    jax.block_until_ready((target_repr, prediction))

    # Correctness vs bf16-matched pure-JAX reference.
    target_ref = _mlp2_ref(x2, *enc_params)
    online_ref = _mlp2_ref(x1, *enc_params)
    pred_ref = _mlp2_ref(online_ref, *pred_params)
    assert target_repr.shape == (N, F_OUT) and prediction.shape == (N, F_OUT)
    assert jnp.allclose(target_repr, target_ref, atol=2e-2, rtol=2e-2)
    assert jnp.allclose(prediction, pred_ref, atol=2e-2, rtol=2e-2)

    # Exercise the row-tiled grid path (ragged N, grid > 1).
    N2 = 300
    kx3, kx4 = jax.random.split(jax.random.PRNGKey(1))
    x3 = jax.random.normal(kx3, (N2, F_IN), jnp.float32)
    x4 = jax.random.normal(kx4, (N2, F_IN), jnp.float32)
    t2, p2 = bgrl_forward(x3, x4, model.online_encoder, model.target_encoder,
                          model.predictor, tile_n=128)
    jax.block_until_ready((t2, p2))
    t2_ref = _mlp2_ref(x4, *model.target_encoder)
    p2_ref = _mlp2_ref(_mlp2_ref(x3, *model.online_encoder), *model.predictor)
    assert t2.shape == (N2, F_OUT) and p2.shape == (N2, F_OUT)
    assert jnp.allclose(t2, t2_ref, atol=2e-2, rtol=2e-2)
    assert jnp.allclose(p2, p2_ref, atol=2e-2, rtol=2e-2)

    # EMA update (plain JAX, matches the @torch.no_grad() method).
    model.exp_moving_avg(0.99)
    _ = model.get_trained_encoder()

    print("KERNEL_OK")
</pallas_src>

<mosaic_0001>
module attributes {stable_mosaic.version = 11 : i64} {
  func.func @_bgrl_fused_kernel(%arg0: i32, %arg1: memref<8x128xbf16, #tpu.memory_space<vmem>>, %arg2: memref<8x128xbf16, #tpu.memory_space<vmem>>, %arg3: memref<128x128xbf16, #tpu.memory_space<vmem>>, %arg4: memref<1x128xf32, #tpu.memory_space<vmem>>, %arg5: memref<128x128xbf16, #tpu.memory_space<vmem>>, %arg6: memref<1x128xf32, #tpu.memory_space<vmem>>, %arg7: memref<128x128xbf16, #tpu.memory_space<vmem>>, %arg8: memref<1x128xf32, #tpu.memory_space<vmem>>, %arg9: memref<128x128xbf16, #tpu.memory_space<vmem>>, %arg10: memref<1x128xf32, #tpu.memory_space<vmem>>, %arg11: memref<128x128xbf16, #tpu.memory_space<vmem>>, %arg12: memref<1x128xf32, #tpu.memory_space<vmem>>, %arg13: memref<128x128xbf16, #tpu.memory_space<vmem>>, %arg14: memref<1x128xf32, #tpu.memory_space<vmem>>, %arg15: memref<8x128xf32, #tpu.memory_space<vmem>>, %arg16: memref<8x128xf32, #tpu.memory_space<vmem>>) attributes {dimension_semantics = [#tpu.dimension_semantics<parallel>], iteration_bounds = array<i64: 1>, scalar_prefetch = 0 : i64, scratch_operands = 0 : i64, tpu.core_type = #tpu.core_type<tc>, window_params = [{transform_indices = @transform_0, window_bounds = array<i64: 8, 128>}, {transform_indices = @transform_1, window_bounds = array<i64: 8, 128>}, {pipeline_mode = #tpu.pipeline_mode<synchronous>, transform_indices = @transform_2, window_bounds = array<i64: 128, 128>}, {pipeline_mode = #tpu.pipeline_mode<synchronous>, transform_indices = @transform_3, window_bounds = array<i64: 1, 128>}, {pipeline_mode = #tpu.pipeline_mode<synchronous>, transform_indices = @transform_4, window_bounds = array<i64: 128, 128>}, {pipeline_mode = #tpu.pipeline_mode<synchronous>, transform_indices = @transform_5, window_bounds = array<i64: 1, 128>}, {pipeline_mode = #tpu.pipeline_mode<synchronous>, transform_indices = @transform_6, window_bounds = array<i64: 128, 128>}, {pipeline_mode = #tpu.pipeline_mode<synchronous>, transform_indices = @transform_7, window_bounds = array<i64: 1, 128>}, {pipeline_mode = #tpu.pipeline_mode<synchronous>, transform_indices = @transform_8, window_bounds = array<i64: 128, 128>}, {pipeline_mode = #tpu.pipeline_mode<synchronous>, transform_indices = @transform_9, window_bounds = array<i64: 1, 128>}, {pipeline_mode = #tpu.pipeline_mode<synchronous>, transform_indices = @transform_10, window_bounds = array<i64: 128, 128>}, {pipeline_mode = #tpu.pipeline_mode<synchronous>, transform_indices = @transform_11, window_bounds = array<i64: 1, 128>}, {pipeline_mode = #tpu.pipeline_mode<synchronous>, transform_indices = @transform_12, window_bounds = array<i64: 128, 128>}, {pipeline_mode = #tpu.pipeline_mode<synchronous>, transform_indices = @transform_13, window_bounds = array<i64: 1, 128>}, {transform_indices = @transform_14, window_bounds = array<i64: 8, 128>}, {transform_indices = @transform_15, window_bounds = array<i64: 8, 128>}]} {
    %c0 = arith.constant 0 : index
    %c0_0 = arith.constant 0 : index
    %0 = vector.load %arg2[%c0, %c0_0] : memref<8x128xbf16, #tpu.memory_space<vmem>>, vector<8x128xbf16>
    %c0_1 = arith.constant 0 : index
    %c0_2 = arith.constant 0 : index
    %1 = vector.load %arg7[%c0_1, %c0_2] : memref<128x128xbf16, #tpu.memory_space<vmem>>, vector<128x128xbf16>
    %cst = arith.constant dense<0.000000e+00> : vector<8x128xf32>
    %2 = tpu.matmul %0, %1, %cst {dimension_numbers = #tpu.dot_dimension_numbers<[1], [0], [0], [1], [0, 0, 1, 1], [], []>} : vector<8x128xbf16>, vector<128x128xbf16>, vector<8x128xf32> -> vector<8x128xf32>
    %c0_3 = arith.constant 0 : index
    %c0_4 = arith.constant 0 : index
    %3 = vector.load %arg8[%c0_3, %c0_4] : memref<1x128xf32, #tpu.memory_space<vmem>>, vector<1x128xf32>
    %4 = vector.broadcast %3 : vector<1x128xf32> to vector<8x128xf32>
    %5 = arith.addf %2, %4 : vector<8x128xf32>
    %cst_5 = arith.constant 0.000000e+00 : f32
    %6 = vector.broadcast %cst_5 : f32 to vector<8x128xf32>
    %7 = arith.maximumf %5, %6 : vector<8x128xf32>
    %8 = arith.truncf %7 : vector<8x128xf32> to vector<8x128xbf16>
    %c0_6 = arith.constant 0 : index
    %c0_7 = arith.constant 0 : index
    %9 = vector.load %arg9[%c0_6, %c0_7] : memref<128x128xbf16, #tpu.memory_space<vmem>>, vector<128x128xbf16>
    %cst_8 = arith.constant dense<0.000000e+00> : vector<8x128xf32>
    %10 = tpu.matmul %8, %9, %cst_8 {dimension_numbers = #tpu.dot_dimension_numbers<[1], [0], [0], [1], [0, 0, 1, 1], [], []>} : vector<8x128xbf16>, vector<128x128xbf16>, vector<8x128xf32> -> vector<8x128xf32>
    %c0_9 = arith.constant 0 : index
    %c0_10 = arith.constant 0 : index
    %11 = vector.load %arg10[%c0_9, %c0_10] : memref<1x128xf32, #tpu.memory_space<vmem>>, vector<1x128xf32>
    %12 = vector.broadcast %11 : vector<1x128xf32> to vector<8x128xf32>
    %13 = arith.addf %10, %12 : vector<8x128xf32>
    %c0_11 = arith.constant 0 : index
    %c0_12 = arith.constant 0 : index
    %14 = vector.load %arg15[%c0_11, %c0_12] : memref<8x128xf32, #tpu.memory_space<vmem>>, vector<8x128xf32>
    tpu.vector_store %arg15[%c0_11, %c0_12], %13 {strides = array<i32>} : memref<8x128xf32, #tpu.memory_space<vmem>>, vector<8x128xf32>,
    %c0_13 = arith.constant 0 : index
    %c0_14 = arith.constant 0 : index
    %15 = vector.load %arg1[%c0_13, %c0_14] : memref<8x128xbf16, #tpu.memory_space<vmem>>, vector<8x128xbf16>
    %c0_15 = arith.constant 0 : index
    %c0_16 = arith.constant 0 : index
    %16 = vector.load %arg3[%c0_15, %c0_16] : memref<128x128xbf16, #tpu.memory_space<vmem>>, vector<128x128xbf16>
    %cst_17 = arith.constant dense<0.000000e+00> : vector<8x128xf32>
    %17 = tpu.matmul %15, %16, %cst_17 {dimension_numbers = #tpu.dot_dimension_numbers<[1], [0], [0], [1], [0, 0, 1, 1], [], []>} : vector<8x128xbf16>, vector<128x128xbf16>, vector<8x128xf32> -> vector<8x128xf32>
    %c0_18 = arith.constant 0 : index
    %c0_19 = arith.constant 0 : index
    %18 = vector.load %arg4[%c0_18, %c0_19] : memref<1x128xf32, #tpu.memory_space<vmem>>, vector<1x128xf32>
    %19 = vector.broadcast %18 : vector<1x128xf32> to vector<8x128xf32>
    %20 = arith.addf %17, %19 : vector<8x128xf32>
    %cst_20 = arith.constant 0.000000e+00 : f32
    %21 = vector.broadcast %cst_20 : f32 to vector<8x128xf32>
    %22 = arith.maximumf %20, %21 : vector<8x128xf32>
    %23 = arith.truncf %22 : vector<8x128xf32> to vector<8x128xbf16>
    %c0_21 = arith.constant 0 : index
    %c0_22 = arith.constant 0 : index
    %24 = vector.load %arg5[%c0_21, %c0_22] : memref<128x128xbf16, #tpu.memory_space<vmem>>, vector<128x128xbf16>
    %cst_23 = arith.constant dense<0.000000e+00> : vector<8x128xf32>
    %25 = tpu.matmul %23, %24, %cst_23 {dimension_numbers = #tpu.dot_dimension_numbers<[1], [0], [0], [1], [0, 0, 1, 1], [], []>} : vector<8x128xbf16>, vector<128x128xbf16>, vector<8x128xf32> -> vector<8x128xf32>
    %c0_24 = arith.constant 0 : index
    %c0_25 = arith.constant 0 : index
    %26 = vector.load %arg6[%c0_24, %c0_25] : memref<1x128xf32, #tpu.memory_space<vmem>>, vector<1x128xf32>
    %27 = vector.broadcast %26 : vector<1x128xf32> to vector<8x128xf32>
    %28 = arith.addf %25, %27 : vector<8x128xf32>
    %29 = arith.truncf %28 : vector<8x128xf32> to vector<8x128xbf16>
    %c0_26 = arith.constant 0 : index
    %c0_27 = arith.constant 0 : index
    %30 = vector.load %arg11[%c0_26, %c0_27] : memref<128x128xbf16, #tpu.memory_space<vmem>>, vector<128x128xbf16>
    %cst_28 = arith.constant dense<0.000000e+00> : vector<8x128xf32>
    %31 = tpu.matmul %29, %30, %cst_28 {dimension_numbers = #tpu.dot_dimension_numbers<[1], [0], [0], [1], [0, 0, 1, 1], [], []>} : vector<8x128xbf16>, vector<128x128xbf16>, vector<8x128xf32> -> vector<8x128xf32>
    %c0_29 = arith.constant 0 : index
    %c0_30 = arith.constant 0 : index
    %32 = vector.load %arg12[%c0_29, %c0_30] : memref<1x128xf32, #tpu.memory_space<vmem>>, vector<1x128xf32>
    %33 = vector.broadcast %32 : vector<1x128xf32> to vector<8x128xf32>
    %34 = arith.addf %31, %33 : vector<8x128xf32>
    %cst_31 = arith.constant 0.000000e+00 : f32
    %35 = vector.broadcast %cst_31 : f32 to vector<8x128xf32>
    %36 = arith.maximumf %34, %35 : vector<8x128xf32>
    %37 = arith.truncf %36 : vector<8x128xf32> to vector<8x128xbf16>
    %c0_32 = arith.constant 0 : index
    %c0_33 = arith.constant 0 : index
    %38 = vector.load %arg13[%c0_32, %c0_33] : memref<128x128xbf16, #tpu.memory_space<vmem>>, vector<128x128xbf16>
    %cst_34 = arith.constant dense<0.000000e+00> : vector<8x128xf32>
    %39 = tpu.matmul %37, %38, %cst_34 {dimension_numbers = #tpu.dot_dimension_numbers<[1], [0], [0], [1], [0, 0, 1, 1], [], []>} : vector<8x128xbf16>, vector<128x128xbf16>, vector<8x128xf32> -> vector<8x128xf32>
    %c0_35 = arith.constant 0 : index
    %c0_36 = arith.constant 0 : index
    %40 = vector.load %arg14[%c0_35, %c0_36] : memref<1x128xf32, #tpu.memory_space<vmem>>, vector<1x128xf32>
    %41 = vector.broadcast %40 : vector<1x128xf32> to vector<8x128xf32>
    %42 = arith.addf %39, %41 : vector<8x128xf32>
    %c0_37 = arith.constant 0 : index
    %c0_38 = arith.constant 0 : index
    %43 = vector.load %arg16[%c0_37, %c0_38] : memref<8x128xf32, #tpu.memory_space<vmem>>, vector<8x128xf32>
    tpu.vector_store %arg16[%c0_37, %c0_38], %42 {strides = array<i32>} : memref<8x128xf32, #tpu.memory_space<vmem>>, vector<8x128xf32>,
    return
  }
  func.func @transform_0(%arg0: i32) -> (i32, i32) {
    %c0_i32 = arith.constant 0 : i32
    %c0_i32_0 = arith.constant 0 : i32
    return %arg0, %c0_i32 : i32, i32
  }
  func.func @transform_1(%arg0: i32) -> (i32, i32) {
    %c0_i32 = arith.constant 0 : i32
    %c0_i32_0 = arith.constant 0 : i32
    return %arg0, %c0_i32 : i32, i32
  }
  func.func @transform_2(%arg0: i32) -> (i32, i32) {
    %c0_i32 = arith.constant 0 : i32
    %c0_i32_0 = arith.constant 0 : i32
    %c0_i32_1 = arith.constant 0 : i32
    return %c0_i32, %c0_i32_0 : i32, i32
  }
  func.func @transform_3(%arg0: i32) -> (i32, i32) {
    %c0_i32 = arith.constant 0 : i32
    %c0_i32_0 = arith.constant 0 : i32
    %c0_i32_1 = arith.constant 0 : i32
    return %c0_i32, %c0_i32_0 : i32, i32
  }
  func.func @transform_4(%arg0: i32) -> (i32, i32) {
    %c0_i32 = arith.constant 0 : i32
    %c0_i32_0 = arith.constant 0 : i32
    %c0_i32_1 = arith.constant 0 : i32
    return %c0_i32, %c0_i32_0 : i32, i32
  }
  func.func @transform_5(%arg0: i32) -> (i32, i32) {
    %c0_i32 = arith.constant 0 : i32
    %c0_i32_0 = arith.constant 0 : i32
    %c0_i32_1 = arith.constant 0 : i32
    return %c0_i32, %c0_i32_0 : i32, i32
  }
  func.func @transform_6(%arg0: i32) -> (i32, i32) {
    %c0_i32 = arith.constant 0 : i32
    %c0_i32_0 = arith.constant 0 : i32
    %c0_i32_1 = arith.constant 0 : i32
    return %c0_i32, %c0_i32_0 : i32, i32
  }
  func.func @transform_7(%arg0: i32) -> (i32, i32) {
    %c0_i32 = arith.constant 0 : i32
    %c0_i32_0 = arith.constant 0 : i32
    %c0_i32_1 = arith.constant 0 : i32
    return %c0_i32, %c0_i32_0 : i32, i32
  }
  func.func @transform_8(%arg0: i32) -> (i32, i32) {
    %c0_i32 = arith.constant 0 : i32
    %c0_i32_0 = arith.constant 0 : i32
    %c0_i32_1 = arith.constant 0 : i32
    return %c0_i32, %c0_i32_0 : i32, i32
  }
  func.func @transform_9(%arg0: i32) -> (i32, i32) {
    %c0_i32 = arith.constant 0 : i32
    %c0_i32_0 = arith.constant 0 : i32
    %c0_i32_1 = arith.constant 0 : i32
    return %c0_i32, %c0_i32_0 : i32, i32
  }
  func.func @transform_10(%arg0: i32) -> (i32, i32) {
    %c0_i32 = arith.constant 0 : i32
    %c0_i32_0 = arith.constant 0 : i32
    %c0_i32_1 = arith.constant 0 : i32
    return %c0_i32, %c0_i32_0 : i32, i32
  }
  func.func @transform_11(%arg0: i32) -> (i32, i32) {
    %c0_i32 = arith.constant 0 : i32
    %c0_i32_0 = arith.constant 0 : i32
    %c0_i32_1 = arith.constant 0 : i32
    return %c0_i32, %c0_i32_0 : i32, i32
  }
  func.func @transform_12(%arg0: i32) -> (i32, i32) {
    %c0_i32 = arith.constant 0 : i32
    %c0_i32_0 = arith.constant 0 : i32
    %c0_i32_1 = arith.constant 0 : i32
    return %c0_i32, %c0_i32_0 : i32, i32
  }
  func.func @transform_13(%arg0: i32) -> (i32, i32) {
    %c0_i32 = arith.constant 0 : i32
    %c0_i32_0 = arith.constant 0 : i32
    %c0_i32_1 = arith.constant 0 : i32
    return %c0_i32, %c0_i32_0 : i32, i32
  }
  func.func @transform_14(%arg0: i32) -> (i32, i32) {
    %c0_i32 = arith.constant 0 : i32
    %c0_i32_0 = arith.constant 0 : i32
    return %arg0, %c0_i32 : i32, i32
  }
  func.func @transform_15(%arg0: i32) -> (i32, i32) {
    %c0_i32 = arith.constant 0 : i32
    %c0_i32_0 = arith.constant 0 : i32
    return %arg0, %c0_i32 : i32, i32
  }
}

</mosaic_0001>

<llo_original>
// kernel: tpu_custom_call.1
$region0: #{tpu_custom_call.1}
  #allocation0 [shape = 'u32[]', space=smem, size = 0x4, offset = 0x4, fixed_abs, tag = 'smem constant byte address 0x4 - core index']
  #allocation1 [shape = 'u32[144,128]{1,0:T(1,128)}', space=vmem, size = 0x12000, scoped, tag = 'internal scratch']
  %s0 = inlined_call_operand.hbm [shape: bf16[8,128], index: 0, kind: input, shape index: {}]
  %s1 = inlined_call_operand.hbm [shape: bf16[8,128], index: 1, kind: input, shape index: {}]
  %s2 = inlined_call_operand.hbm [shape: bf16[128,128], index: 2, kind: input, shape index: {}]
  %s3 = inlined_call_operand.vmem [shape: f32[1,128], index: 3, kind: input, shape index: {}]
  %s4 = inlined_call_operand.hbm [shape: bf16[128,128], index: 4, kind: input, shape index: {}]
  %s5 = inlined_call_operand.vmem [shape: f32[1,128], index: 5, kind: input, shape index: {}]
  %s6 = inlined_call_operand.hbm [shape: bf16[128,128], index: 6, kind: input, shape index: {}]
  %s7 = inlined_call_operand.vmem [shape: f32[1,128], index: 7, kind: input, shape index: {}]
  %s8 = inlined_call_operand.hbm [shape: bf16[128,128], index: 8, kind: input, shape index: {}]
  %s9 = inlined_call_operand.vmem [shape: f32[1,128], index: 9, kind: input, shape index: {}]
  %s10 = inlined_call_operand.hbm [shape: bf16[128,128], index: 10, kind: input, shape index: {}]
  %s11 = inlined_call_operand.vmem [shape: f32[1,128], index: 11, kind: input, shape index: {}]
  %s12 = inlined_call_operand.hbm [shape: bf16[128,128], index: 12, kind: input, shape index: {}]
  %s13 = inlined_call_operand.vmem [shape: f32[1,128], index: 13, kind: input, shape index: {}]
  %s14 = inlined_call_operand.hbm [shape: f32[8,128], index: 14, kind: output, shape index: {0}]
  %s15 = inlined_call_operand.hbm [shape: f32[8,128], index: 15, kind: output, shape index: {1}]
  %16 = xla_tuple %s14, %s15
  %s17 = sld [smem:[#allocation0]]
  $region106: #{tpu_custom_call.1} parent=0
    _
  %s19 = ssub.s32 1, %s17
  %s20 = scalar_select 0, %s19, %s17
  $region1: #{tpu_custom_call.1} parent=0
    #allocation2 [shape = 'u8[2048]{0}', space=vmem, size = 0x800, scoped, tag = 'input window, operand 0, single buffered']
    #allocation3 [shape = 's32[1]{0}', space=sflag, size = 0x4, scoped, tag = 'scoped memory for tpu_custom_call.1']
    #allocation4 [shape = 's32[1]{0}', space=sflag, size = 0x4, scoped, tag = 'scoped memory for tpu_custom_call.1']
    #allocation5 [shape = 'u8[2048]{0}', space=vmem, size = 0x800, scoped, tag = 'input window, operand 1, single buffered']
    #allocation6 [shape = 's32[1]{0}', space=sflag, size = 0x4, scoped, tag = 'scoped memory for tpu_custom_call.1']
    #allocation7 [shape = 'u8[32768]{0}', space=vmem, size = 0x8000, scoped, tag = 'input window, operand 2, single buffered']
    #allocation8 [shape = 'u8[32768]{0}', space=vmem, size = 0x8000, scoped, tag = 'input window, operand 4, single buffered']
    #allocation9 [shape = 's32[1]{0}', space=sflag, size = 0x4, scoped, tag = 'scoped memory for tpu_custom_call.1']
    #allocation10 [shape = 'u8[32768]{0}', space=vmem, size = 0x8000, scoped, tag = 'input window, operand 6, single buffered']
    #allocation11 [shape = 'u8[32768]{0}', space=vmem, size = 0x8000, scoped, tag = 'input window, operand 8, single buffered']
    #allocation12 [shape = 's32[1]{0}', space=sflag, size = 0x4, scoped, tag = 'scoped memory for tpu_custom_call.1']
    #allocation13 [shape = 'u8[32768]{0}', space=vmem, size = 0x8000, scoped, tag = 'input window, operand 10, single buffered']
    #allocation14 [shape = 'u8[32768]{0}', space=vmem, size = 0x8000, scoped, tag = 'input window, operand 12, single buffered']
    #allocation15 [shape = 's32[1]{0}', space=sflag, size = 0x4, scoped, tag = 'scoped memory for tpu_custom_call.1']
    #allocation16 [shape = 'u8[4096]{0}', space=vmem, size = 0x1000, scoped, tag = 'output window, operand 0, single buffered']
    #allocation17 [shape = 'u8[4096]{0}', space=vmem, size = 0x1000, scoped, tag = 'output window, operand 1, single buffered']
    #allocation18 [shape = 's32[1]{0}', space=sflag, size = 0x4, scoped, tag = 'scoped memory for tpu_custom_call.1']
    %21 = vsyncpa [#allocation3], 0
    %22 = vsyncpa [#allocation6], 0
    %23 = vsyncpa [#allocation9], 0
    %24 = vsyncpa [#allocation12], 0
    %25 = vsyncpa [#allocation15], 0
    %26 = vsyncpa [#allocation4], 0
    %27 = vsyncpa [#allocation18], 0
    // Predicated region
    $region2: #{tpu_custom_call.1} parent=1 // pred_check
      _
    $region3: #{tpu_custom_call.1} parent=1 // pred_check_branch
      %29 = sbr.rel (0) target = $region5
    $region4: #{tpu_custom_call.1} parent=1 // pred_region
      %s31 = ssub.s32 64, 64
      %32 = vsyncadd [#allocation3], %s31
      %s34 = sshll.u32 [#allocation2], 4
      %s35 = int_to_ptr.vmem [resolvable:$true] %s34
      %37 = dma.hbm_to_vmem [thread:$0]  %s0, 64, %s35, [#allocation3]
    $region5: #{tpu_custom_call.1} parent=1 // pred_fallthru
      _
    // Predicated region
    $region6: #{tpu_custom_call.1} parent=1 // pred_check
      _
    $region7: #{tpu_custom_call.1} parent=1 // pred_check_branch
      %39 = sbr.rel (0) target = $region9
    $region8: #{tpu_custom_call.1} parent=1 // pred_region
      %s41 = ssub.s32 64, 64
      %42 = vsyncadd [#allocation6], %s41
      %s44 = sshll.u32 [#allocation5], 4
      %s45 = int_to_ptr.vmem [resolvable:$true] %s44
      %47 = dma.hbm_to_vmem [thread:$0]  %s1, 64, %s45, [#allocation6]
    $region9: #{tpu_custom_call.1} parent=1 // pred_fallthru
      _
    // Predicated region
    $region10: #{tpu_custom_call.1} parent=1 // pred_check
      _
    $region11: #{tpu_custom_call.1} parent=1 // pred_check_branch
      %49 = sbr.rel (0) target = $region13
    $region12: #{tpu_custom_call.1} parent=1 // pred_region
      %s51 = ssub.s32 1024, 1024
      %52 = vsyncadd [#allocation6], %s51
      %s53 = sshll.u32 [#allocation7], 4
      %s54 = int_to_ptr.vmem [resolvable:$true] %s53
      %59 = dma.hbm_to_vmem [thread:$0]  %s2, 1024, %s54, [#allocation6], 64, 64, 4
    $region13: #{tpu_custom_call.1} parent=1 // pred_fallthru
      _
    // Predicated region
    $region14: #{tpu_custom_call.1} parent=1 // pred_check
      _
    $region15: #{tpu_custom_call.1} parent=1 // pred_check_branch
      %61 = sbr.rel (0) target = $region17
    $region16: #{tpu_custom_call.1} parent=1 // pred_region
      _
    $region17: #{tpu_custom_call.1} parent=1 // pred_fallthru
      _
    // Predicated region
    $region18: #{tpu_custom_call.1} parent=1 // pred_check
      _
    $region19: #{tpu_custom_call.1} parent=1 // pred_check_branch
      %63 = sbr.rel (0) target = $region21
    $region20: #{tpu_custom_call.1} parent=1 // pred_region
      %s65 = ssub.s32 1024, 1024
      %66 = vsyncadd [#allocation9], %s65
      %s67 = sshll.u32 [#allocation8], 4
      %s68 = int_to_ptr.vmem [resolvable:$true] %s67
      %73 = dma.hbm_to_vmem [thread:$0]  %s4, 1024, %s68, [#allocation9], 64, 64, 4
    $region21: #{tpu_custom_call.1} parent=1 // pred_fallthru
      _
    // Predicated region
    $region22: #{tpu_custom_call.1} parent=1 // pred_check
      _
    $region23: #{tpu_custom_call.1} parent=1 // pred_check_branch
      %75 = sbr.rel (0) target = $region25
    $region24: #{tpu_custom_call.1} parent=1 // pred_region
      _
    $region25: #{tpu_custom_call.1} parent=1 // pred_fallthru
      _
    // Predicated region
    $region26: #{tpu_custom_call.1} parent=1 // pred_check
      _
    $region27: #{tpu_custom_call.1} parent=1 // pred_check_branch
      %77 = sbr.rel (0) target = $region29
    $region28: #{tpu_custom_call.1} parent=1 // pred_region
      %s79 = ssub.s32 1024, 1024
      %80 = vsyncadd [#allocation9], %s79
      %s81 = sshll.u32 [#allocation10], 4
      %s82 = int_to_ptr.vmem [resolvable:$true] %s81
      %87 = dma.hbm_to_vmem [thread:$0]  %s6, 1024, %s82, [#allocation9], 64, 64, 4
    $region29: #{tpu_custom_call.1} parent=1 // pred_fallthru
      _
    // Predicated region
    $region30: #{tpu_custom_call.1} parent=1 // pred_check
      _
    $region31: #{tpu_custom_call.1} parent=1 // pred_check_branch
      %89 = sbr.rel (0) target = $region33
    $region32: #{tpu_custom_call.1} parent=1 // pred_region
      _
    $region33: #{tpu_custom_call.1} parent=1 // pred_fallthru
      _
    // Predicated region
    $region34: #{tpu_custom_call.1} parent=1 // pred_check
      _
    $region35: #{tpu_custom_call.1} parent=1 // pred_check_branch
      %91 = sbr.rel (0) target = $region37
    $region36: #{tpu_custom_call.1} parent=1 // pred_region
      %s93 = ssub.s32 1024, 1024
      %94 = vsyncadd [#allocation12], %s93
      %s95 = sshll.u32 [#allocation11], 4
      %s96 = int_to_ptr.vmem [resolvable:$true] %s95
      %101 = dma.hbm_to_vmem [thread:$0]  %s8, 1024, %s96, [#allocation12], 64, 64, 4
    $region37: #{tpu_custom_call.1} parent=1 // pred_fallthru
      _
    // Predicated region
    $region38: #{tpu_custom_call.1} parent=1 // pred_check
      _
    $region39: #{tpu_custom_call.1} parent=1 // pred_check_branch
      %103 = sbr.rel (0) target = $region41
    $region40: #{tpu_custom_call.1} parent=1 // pred_region
      _
    $region41: #{tpu_custom_call.1} parent=1 // pred_fallthru
      _
    // Predicated region
    $region42: #{tpu_custom_call.1} parent=1 // pred_check
      _
    $region43: #{tpu_custom_call.1} parent=1 // pred_check_branch
      %105 = sbr.rel (0) target = $region45
    $region44: #{tpu_custom_call.1} parent=1 // pred_region
      %s107 = ssub.s32 1024, 1024
      %108 = vsyncadd [#allocation12], %s107
      %s109 = sshll.u32 [#allocation13], 4
      %s110 = int_to_ptr.vmem [resolvable:$true] %s109
      %115 = dma.hbm_to_vmem [thread:$0]  %s10, 1024, %s110, [#allocation12], 64, 64, 4
    $region45: #{tpu_custom_call.1} parent=1 // pred_fallthru
      _
    // Predicated region
    $region46: #{tpu_custom_call.1} parent=1 // pred_check
      _
    $region47: #{tpu_custom_call.1} parent=1 // pred_check_branch
      %117 = sbr.rel (0) target = $region49
    $region48: #{tpu_custom_call.1} parent=1 // pred_region
      _
    $region49: #{tpu_custom_call.1} parent=1 // pred_fallthru
      _
    // Predicated region
    $region50: #{tpu_custom_call.1} parent=1 // pred_check
      _
    $region51: #{tpu_custom_call.1} parent=1 // pred_check_branch
      %119 = sbr.rel (0) target = $region53
    $region52: #{tpu_custom_call.1} parent=1 // pred_region
      %s121 = ssub.s32 1024, 1024
      %122 = vsyncadd [#allocation15], %s121
      %s123 = sshll.u32 [#allocation14], 4
      %s124 = int_to_ptr.vmem [resolvable:$true] %s123
      %129 = dma.hbm_to_vmem [thread:$0]  %s12, 1024, %s124, [#allocation15], 64, 64, 4
    $region53: #{tpu_custom_call.1} parent=1 // pred_fallthru
      _
    // Predicated region
    $region54: #{tpu_custom_call.1} parent=1 // pred_check
      _
    $region55: #{tpu_custom_call.1} parent=1 // pred_check_branch
      %131 = sbr.rel (0) target = $region57
    $region56: #{tpu_custom_call.1} parent=1 // pred_region
      _
    $region57: #{tpu_custom_call.1} parent=1 // pred_fallthru
      _
    // Predicated region
    $region58: #{tpu_custom_call.1} parent=1 // pred_check
      _
    $region59: #{tpu_custom_call.1} parent=1 // pred_check_branch
      %133 = sbr.rel (0) target = $region61
    $region60: #{tpu_custom_call.1} parent=1 // pred_region
      %134 = dma.done [#allocation3], 64
    $region61: #{tpu_custom_call.1} parent=1 // pred_fallthru
      _
    // Predicated region
    $region62: #{tpu_custom_call.1} parent=1 // pred_check
      _
    $region63: #{tpu_custom_call.1} parent=1 // pred_check_branch
      %136 = sbr.rel (0) target = $region65
    $region64: #{tpu_custom_call.1} parent=1 // pred_region
      %137 = dma.done [#allocation6], 64
    $region65: #{tpu_custom_call.1} parent=1 // pred_fallthru
      _
    // Predicated region
    $region66: #{tpu_custom_call.1} parent=1 // pred_check
      _
    $region67: #{tpu_custom_call.1} parent=1 // pred_check_branch
      %139 = sbr.rel (0) target = $region69
    $region68: #{tpu_custom_call.1} parent=1 // pred_region
      %140 = dma.done [#allocation6], 1024
    $region69: #{tpu_custom_call.1} parent=1 // pred_fallthru
      _
    // Predicated region
    $region70: #{tpu_custom_call.1} parent=1 // pred_check
      _
    $region71: #{tpu_custom_call.1} parent=1 // pred_check_branch
      %142 = sbr.rel (0) target = $region73
    $region72: #{tpu_custom_call.1} parent=1 // pred_region
      %143 = dma.done [#allocation9], 1024
    $region73: #{tpu_custom_call.1} parent=1 // pred_fallthru
      _
    // Predicated region
    $region74: #{tpu_custom_call.1} parent=1 // pred_check
      _
    $region75: #{tpu_custom_call.1} parent=1 // pred_check_branch
      %145 = sbr.rel (0) target = $region77
    $region76: #{tpu_custom_call.1} parent=1 // pred_region
      %146 = dma.done [#allocation9], 1024
    $region77: #{tpu_custom_call.1} parent=1 // pred_fallthru
      _
    // Predicated region
    $region78: #{tpu_custom_call.1} parent=1 // pred_check
      _
    $region79: #{tpu_custom_call.1} parent=1 // pred_check_branch
      %148 = sbr.rel (0) target = $region81
    $region80: #{tpu_custom_call.1} parent=1 // pred_region
      %149 = dma.done [#allocation12], 1024
    $region81: #{tpu_custom_call.1} parent=1 // pred_fallthru
      _
    // Predicated region
    $region82: #{tpu_custom_call.1} parent=1 // pred_check
      _
    $region83: #{tpu_custom_call.1} parent=1 // pred_check_branch
      %151 = sbr.rel (0) target = $region85
    $region84: #{tpu_custom_call.1} parent=1 // pred_region
      %152 = dma.done [#allocation12], 1024
    $region85: #{tpu_custom_call.1} parent=1 // pred_fallthru
      _
    // Predicated region
    $region86: #{tpu_custom_call.1} parent=1 // pred_check
      _
    $region87: #{tpu_custom_call.1} parent=1 // pred_check_branch
      %154 = sbr.rel (0) target = $region89
    $region88: #{tpu_custom_call.1} parent=1 // pred_region
      %155 = dma.done [#allocation15], 1024
    $region89: #{tpu_custom_call.1} parent=1 // pred_fallthru
      _
    %v157 = vld [vmem:[#allocation5] sm:$0xf]
    %v158 = vld [vmem:[#allocation10] sm:$0xf]
    %v159 = vld [vmem:[#allocation10 + $0x4] sm:$0xf]
    %v160 = vld [vmem:[#allocation10 + $0x8] sm:$0xf]
    %v161 = vld [vmem:[#allocation10 + $0xc] sm:$0xf]
    %v162 = vld [vmem:[#allocation10 + $0x10] sm:$0xf]
    %v163 = vld [vmem:[#allocation10 + $0x14] sm:$0xf]
    %v164 = vld [vmem:[#allocation10 + $0x18] sm:$0xf]
    %v165 = vld [vmem:[#allocation10 + $0x1c] sm:$0xf]
    %v166 = vld [vmem:[#allocation10 + $0x20] sm:$0xf]
    %v167 = vld [vmem:[#allocation10 + $0x24] sm:$0xf]
    %v168 = vld [vmem:[#allocation10 + $0x28] sm:$0xf]
    %v169 = vld [vmem:[#allocation10 + $0x2c] sm:$0xf]
    %v170 = vld [vmem:[#allocation10 + $0x30] sm:$0xf]
    %v171 = vld [vmem:[#allocation10 + $0x34] sm:$0xf]
    %v172 = vld [vmem:[#allocation10 + $0x38] sm:$0xf]
    %v173 = vld [vmem:[#allocation10 + $0x3c] sm:$0xf]
    %v174 = vld [vmem:[%s7] sm:$0x1]
    %v176 = vlaneseq
    %v177 = vshrl.u32 %v176, 7
    %v178 = vsub.s32 0, %v177
    %v179 = vrot.slane %v174, %v178
    %v197 = vunpack.c.l.b16 %v158
    %v198 = vunpack.c.l.b16 %v159
    %v199 = vunpack.c.l.b16 %v160
    %v200 = vunpack.c.l.b16 %v161
    %v201 = vunpack.c.l.b16 %v162
    %v202 = vunpack.c.l.b16 %v163
    %v203 = vunpack.c.l.b16 %v164
    %v204 = vunpack.c.l.b16 %v165
    %v205 = vunpack.c.l.b16 %v166
    %v206 = vunpack.c.l.b16 %v167
    %v207 = vunpack.c.l.b16 %v168
    %v208 = vunpack.c.l.b16 %v169
    %v209 = vunpack.c.l.b16 %v170
    %v210 = vunpack.c.l.b16 %v171
    %v211 = vunpack.c.l.b16 %v172
    %v212 = vunpack.c.l.b16 %v173
    %v213 = vpack.c.b16 %v198, %v197
    %v214 = vpack.c.b16 %v200, %v199
    %v215 = vpack.c.b16 %v202, %v201
    %v216 = vpack.c.b16 %v204, %v203
    %v217 = vpack.c.b16 %v206, %v205
    %v218 = vpack.c.b16 %v208, %v207
    %v219 = vpack.c.b16 %v210, %v209
    %v220 = vpack.c.b16 %v212, %v211
    %229 = vmatprep.subr.bf16.mxu0 0
    %230 = vmatpush1.bf16.msra.mxu0 %v213
    %231 = vmatprep.subr.bf16.mxu0 0
    %232 = vmatpush1.bf16.msra.mxu0 %v214
    %233 = vmatprep.subr.bf16.mxu0 0
    %234 = vmatpush1.bf16.msra.mxu0 %v215
    %235 = vmatprep.subr.bf16.mxu0 0
    %236 = vmatpush1.bf16.msra.mxu0 %v216
    %237 = vmatprep.subr.bf16.mxu0 0
    %238 = vmatpush1.bf16.msra.mxu0 %v217
    %239 = vmatprep.subr.bf16.mxu0 0
    %240 = vmatpush1.bf16.msra.mxu0 %v218
    %241 = vmatprep.subr.bf16.mxu0 0
    %242 = vmatpush1.bf16.msra.mxu0 %v219
    %243 = vmatprep.subr.bf16.mxu0 0
    %244 = vmatpush1.bf16.msra.mxu0 %v220
    %245 = vmatprep.subr.bf16.mxu0 0
    %246 = vmatpush1.bf16.msra.mxu0 0
    %247 = vmatprep.subr.bf16.mxu0 0
    %248 = vmatpush1.bf16.msra.mxu0 0
    %249 = vmatprep.subr.bf16.mxu0 0
    %250 = vmatpush1.bf16.msra.mxu0 0
    %251 = vmatprep.subr.bf16.mxu0 0
    %252 = vmatpush1.bf16.msra.mxu0 0
    %253 = vmatprep.subr.bf16.mxu0 0
    %254 = vmatpush1.bf16.msra.mxu0 0
    %255 = vmatprep.subr.bf16.mxu0 0
    %256 = vmatpush1.bf16.msra.mxu0 0
    %257 = vmatprep.subr.bf16.mxu0 0
    %258 = vmatpush1.bf16.msra.mxu0 0
    %259 = vmatprep.subr.bf16.mxu0 0
    %260 = vmatpush1.bf16.msra.mxu0 0
    %261 = vmatprep.mubr.bf16.mxu0 0
    %262 = vmatmul.mubr.bf16.gmra.mrb[0].mxu0 %v157
    %v263 = vpop.f32.mrb[0].mxu0
    %v264 = vadd.f32 %v179, %v263
    %v265 = vpop.f32.mrb[0].mxu0
    %v266 = vpop.f32.mrb[0].mxu0
    %v267 = vpop.f32.mrb[0].mxu0
    %268 = vdwg.mxu0
    %v269 = vmax.f32 %v264, 0.0
    %v270 = vpack.c.bf16 %v269, %v269
    %v271 = vld [vmem:[#allocation11] sm:$0xf]
    %v272 = vld [vmem:[#allocation11 + $0x4] sm:$0xf]
    %v273 = vld [vmem:[#allocation11 + $0x8] sm:$0xf]
    %v274 = vld [vmem:[#allocation11 + $0xc] sm:$0xf]
    %v275 = vld [vmem:[#allocation11 + $0x10] sm:$0xf]
    %v276 = vld [vmem:[#allocation11 + $0x14] sm:$0xf]
    %v277 = vld [vmem:[#allocation11 + $0x18] sm:$0xf]
    %v278 = vld [vmem:[#allocation11 + $0x1c] sm:$0xf]
    %v279 = vld [vmem:[#allocation11 + $0x20] sm:$0xf]
    %v280 = vld [vmem:[#allocation11 + $0x24] sm:$0xf]
    %v281 = vld [vmem:[#allocation11 + $0x28] sm:$0xf]
    %v282 = vld [vmem:[#allocation11 + $0x2c] sm:$0xf]
    %v283 = vld [vmem:[#allocation11 + $0x30] sm:$0xf]
    %v284 = vld [vmem:[#allocation11 + $0x34] sm:$0xf]
    %v285 = vld [vmem:[#allocation11 + $0x38] sm:$0xf]
    %v286 = vld [vmem:[#allocation11 + $0x3c] sm:$0xf]
    %v287 = vld [vmem:[%s9] sm:$0x1]
    %v289 = vlaneseq
    %v290 = vshrl.u32 %v289, 7
    %v291 = vsub.s32 0, %v290
    %v292 = vrot.slane %v287, %v291
    %v310 = vunpack.c.l.b16 %v271
    %v311 = vunpack.c.l.b16 %v272
    %v312 = vunpack.c.l.b16 %v273
    %v313 = vunpack.c.l.b16 %v274
    %v314 = vunpack.c.l.b16 %v275
    %v315 = vunpack.c.l.b16 %v276
    %v316 = vunpack.c.l.b16 %v277
    %v317 = vunpack.c.l.b16 %v278
    %v318 = vunpack.c.l.b16 %v279
    %v319 = vunpack.c.l.b16 %v280
    %v320 = vunpack.c.l.b16 %v281
    %v321 = vunpack.c.l.b16 %v282
    %v322 = vunpack.c.l.b16 %v283
    %v323 = vunpack.c.l.b16 %v284
    %v324 = vunpack.c.l.b16 %v285
    %v325 = vunpack.c.l.b16 %v286
    %v326 = vpack.c.b16 %v311, %v310
    %v327 = vpack.c.b16 %v313, %v312
    %v328 = vpack.c.b16 %v315, %v314
    %v329 = vpack.c.b16 %v317, %v316
    %v330 = vpack.c.b16 %v319, %v318
    %v331 = vpack.c.b16 %v321, %v320
    %v332 = vpack.c.b16 %v323, %v322
    %v333 = vpack.c.b16 %v325, %v324
    %342 = vmatprep.subr.bf16.mxu0 0
    %343 = vmatpush1.bf16.msra.mxu0 %v326
    %344 = vmatprep.subr.bf16.mxu0 0
    %345 = vmatpush1.bf16.msra.mxu0 %v327
    %346 = vmatprep.subr.bf16.mxu0 0
    %347 = vmatpush1.bf16.msra.mxu0 %v328
    %348 = vmatprep.subr.bf16.mxu0 0
    %349 = vmatpush1.bf16.msra.mxu0 %v329
    %350 = vmatprep.subr.bf16.mxu0 0
    %351 = vmatpush1.bf16.msra.mxu0 %v330
    %352 = vmatprep.subr.bf16.mxu0 0
    %353 = vmatpush1.bf16.msra.mxu0 %v331
    %354 = vmatprep.subr.bf16.mxu0 0
    %355 = vmatpush1.bf16.msra.mxu0 %v332
    %356 = vmatprep.subr.bf16.mxu0 0
    %357 = vmatpush1.bf16.msra.mxu0 %v333
    %358 = vmatprep.subr.bf16.mxu0 0
    %359 = vmatpush1.bf16.msra.mxu0 0
    %360 = vmatprep.subr.bf16.mxu0 0
    %361 = vmatpush1.bf16.msra.mxu0 0
    %362 = vmatprep.subr.bf16.mxu0 0
    %363 = vmatpush1.bf16.msra.mxu0 0
    %364 = vmatprep.subr.bf16.mxu0 0
    %365 = vmatpush1.bf16.msra.mxu0 0
    %366 = vmatprep.subr.bf16.mxu0 0
    %367 = vmatpush1.bf16.msra.mxu0 0
    %368 = vmatprep.subr.bf16.mxu0 0
    %369 = vmatpush1.bf16.msra.mxu0 0
    %370 = vmatprep.subr.bf16.mxu0 0
    %371 = vmatpush1.bf16.msra.mxu0 0
    %372 = vmatprep.subr.bf16.mxu0 0
    %373 = vmatpush1.bf16.msra.mxu0 0
    %374 = vmatprep.mubr.bf16.mxu0 0
    %375 = vmatmul.mubr.bf16.gmra.mrb[0].mxu0 %v270
    %v376 = vpop.f32.mrb[0].mxu0
    %v377 = vadd.f32 %v292, %v376
    %v378 = vpop.f32.mrb[0].mxu0
    %v379 = vpop.f32.mrb[0].mxu0
    %v380 = vpop.f32.mrb[0].mxu0
    %381 = vdwg.mxu0
    %382 = vst [vmem:[#allocation16] sm:$0xff] %v377
    %v383 = vld [vmem:[#allocation2] sm:$0xf]
    %v384 = vld [vmem:[#allocation7] sm:$0xf]
    %v385 = vld [vmem:[#allocation7 + $0x4] sm:$0xf]
    %v386 = vld [vmem:[#allocation7 + $0x8] sm:$0xf]
    %v387 = vld [vmem:[#allocation7 + $0xc] sm:$0xf]
    %v388 = vld [vmem:[#allocation7 + $0x10] sm:$0xf]
    %v389 = vld [vmem:[#allocation7 + $0x14] sm:$0xf]
    %v390 = vld [vmem:[#allocation7 + $0x18] sm:$0xf]
    %v391 = vld [vmem:[#allocation7 + $0x1c] sm:$0xf]
    %v392 = vld [vmem:[#allocation7 + $0x20] sm:$0xf]
    %v393 = vld [vmem:[#allocation7 + $0x24] sm:$0xf]
    %v394 = vld [vmem:[#allocation7 + $0x28] sm:$0xf]
    %v395 = vld [vmem:[#allocation7 + $0x2c] sm:$0xf]
    %v396 = vld [vmem:[#allocation7 + $0x30] sm:$0xf]
    %v397 = vld [vmem:[#allocation7 + $0x34] sm:$0xf]
    %v398 = vld [vmem:[#allocation7 + $0x38] sm:$0xf]
    %v399 = vld [vmem:[#allocation7 + $0x3c] sm:$0xf]
    %v400 = vld [vmem:[%s3] sm:$0x1]
    %v402 = vlaneseq
    %v403 = vshrl.u32 %v402, 7
    %v404 = vsub.s32 0, %v403
    %v405 = vrot.slane %v400, %v404
    %v423 = vunpack.c.l.b16 %v384
    %v424 = vunpack.c.l.b16 %v385
    %v425 = vunpack.c.l.b16 %v386
    %v426 = vunpack.c.l.b16 %v387
    %v427 = vunpack.c.l.b16 %v388
    %v428 = vunpack.c.l.b16 %v389
    %v429 = vunpack.c.l.b16 %v390
    %v430 = vunpack.c.l.b16 %v391
    %v431 = vunpack.c.l.b16 %v392
    %v432 = vunpack.c.l.b16 %v393
    %v433 = vunpack.c.l.b16 %v394
    %v434 = vunpack.c.l.b16 %v395
    %v435 = vunpack.c.l.b16 %v396
    %v436 = vunpack.c.l.b16 %v397
    %v437 = vunpack.c.l.b16 %v398
    %v438 = vunpack.c.l.b16 %v399
    %v439 = vpack.c.b16 %v424, %v423
    %v440 = vpack.c.b16 %v426, %v425
    %v441 = vpack.c.b16 %v428, %v427
    %v442 = vpack.c.b16 %v430, %v429
    %v443 = vpack.c.b16 %v432, %v431
    %v444 = vpack.c.b16 %v434, %v433
    %v445 = vpack.c.b16 %v436, %v435
    %v446 = vpack.c.b16 %v438, %v437
    %455 = vmatprep.subr.bf16.mxu0 0
    %456 = vmatpush1.bf16.msra.mxu0 %v439
    %457 = vmatprep.subr.bf16.mxu0 0
    %458 = vmatpush1.bf16.msra.mxu0 %v440
    %459 = vmatprep.subr.bf16.mxu0 0
    %460 = vmatpush1.bf16.msra.mxu0 %v441
    %461 = vmatprep.subr.bf16.mxu0 0
    %462 = vmatpush1.bf16.msra.mxu0 %v442
    %463 = vmatprep.subr.bf16.mxu0 0
    %464 = vmatpush1.bf16.msra.mxu0 %v443
    %465 = vmatprep.subr.bf16.mxu0 0
    %466 = vmatpush1.bf16.msra.mxu0 %v444
    %467 = vmatprep.subr.bf16.mxu0 0
    %468 = vmatpush1.bf16.msra.mxu0 %v445
    %469 = vmatprep.subr.bf16.mxu0 0
    %470 = vmatpush1.bf16.msra.mxu0 %v446
    %471 = vmatprep.subr.bf16.mxu0 0
    %472 = vmatpush1.bf16.msra.mxu0 0
    %473 = vmatprep.subr.bf16.mxu0 0
    %474 = vmatpush1.bf16.msra.mxu0 0
    %475 = vmatprep.subr.bf16.mxu0 0
    %476 = vmatpush1.bf16.msra.mxu0 0
    %477 = vmatprep.subr.bf16.mxu0 0
    %478 = vmatpush1.bf16.msra.mxu0 0
    %479 = vmatprep.subr.bf16.mxu0 0
    %480 = vmatpush1.bf16.msra.mxu0 0
    %481 = vmatprep.subr.bf16.mxu0 0
    %482 = vmatpush1.bf16.msra.mxu0 0
    %483 = vmatprep.subr.bf16.mxu0 0
    %484 = vmatpush1.bf16.msra.mxu0 0
    %485 = vmatprep.subr.bf16.mxu0 0
    %486 = vmatpush1.bf16.msra.mxu0 0
    %487 = vmatprep.mubr.bf16.mxu0 0
    %488 = vmatmul.mubr.bf16.gmra.mrb[0].mxu0 %v383
    %v489 = vpop.f32.mrb[0].mxu0
    %v490 = vadd.f32 %v405, %v489
    %v491 = vpop.f32.mrb[0].mxu0
    %v492 = vpop.f32.mrb[0].mxu0
    %v493 = vpop.f32.mrb[0].mxu0
    %494 = vdwg.mxu0
    %v495 = vmax.f32 %v490, 0.0
    %v496 = vpack.c.bf16 %v495, %v495
    %v497 = vld [vmem:[#allocation8] sm:$0xf]
    %v498 = vld [vmem:[#allocation8 + $0x4] sm:$0xf]
    %v499 = vld [vmem:[#allocation8 + $0x8] sm:$0xf]
    %v500 = vld [vmem:[#allocation8 + $0xc] sm:$0xf]
    %v501 = vld [vmem:[#allocation8 + $0x10] sm:$0xf]
    %v502 = vld [vmem:[#allocation8 + $0x14] sm:$0xf]
    %v503 = vld [vmem:[#allocation8 + $0x18] sm:$0xf]
    %v504 = vld [vmem:[#allocation8 + $0x1c] sm:$0xf]
    %v505 = vld [vmem:[#allocation8 + $0x20] sm:$0xf]
    %v506 = vld [vmem:[#allocation8 + $0x24] sm:$0xf]
    %v507 = vld [vmem:[#allocation8 + $0x28] sm:$0xf]
    %v508 = vld [vmem:[#allocation8 + $0x2c] sm:$0xf]
    %v509 = vld [vmem:[#allocation8 + $0x30] sm:$0xf]
    %v510 = vld [vmem:[#allocation8 + $0x34] sm:$0xf]
    %v511 = vld [vmem:[#allocation8 + $0x38] sm:$0xf]
    %v512 = vld [vmem:[#allocation8 + $0x3c] sm:$0xf]
    %v513 = vld [vmem:[%s5] sm:$0x1]
    %v515 = vlaneseq
    %v516 = vshrl.u32 %v515, 7
    %v517 = vsub.s32 0, %v516
    %v518 = vrot.slane %v513, %v517
    %v536 = vunpack.c.l.b16 %v497
    %v537 = vunpack.c.l.b16 %v498
    %v538 = vunpack.c.l.b16 %v499
    %v539 = vunpack.c.l.b16 %v500
    %v540 = vunpack.c.l.b16 %v501
    %v541 = vunpack.c.l.b16 %v502
    %v542 = vunpack.c.l.b16 %v503
    %v543 = vunpack.c.l.b16 %v504
    %v544 = vunpack.c.l.b16 %v505
    %v545 = vunpack.c.l.b16 %v506
    %v546 = vunpack.c.l.b16 %v507
    %v547 = vunpack.c.l.b16 %v508
    %v548 = vunpack.c.l.b16 %v509
    %v549 = vunpack.c.l.b16 %v510
    %v550 = vunpack.c.l.b16 %v511
    %v551 = vunpack.c.l.b16 %v512
    %v552 = vpack.c.b16 %v537, %v536
    %v553 = vpack.c.b16 %v539, %v538
    %v554 = vpack.c.b16 %v541, %v540
    %v555 = vpack.c.b16 %v543, %v542
    %v556 = vpack.c.b16 %v545, %v544
    %v557 = vpack.c.b16 %v547, %v546
    %v558 = vpack.c.b16 %v549, %v548
    %v559 = vpack.c.b16 %v551, %v550
    %568 = vmatprep.subr.bf16.mxu0 0
    %569 = vmatpush1.bf16.msra.mxu0 %v552
    %570 = vmatprep.subr.bf16.mxu0 0
    %571 = vmatpush1.bf16.msra.mxu0 %v553
    %572 = vmatprep.subr.bf16.mxu0 0
    %573 = vmatpush1.bf16.msra.mxu0 %v554
    %574 = vmatprep.subr.bf16.mxu0 0
    %575 = vmatpush1.bf16.msra.mxu0 %v555
    %576 = vmatprep.subr.bf16.mxu0 0
    %577 = vmatpush1.bf16.msra.mxu0 %v556
    %578 = vmatprep.subr.bf16.mxu0 0
    %579 = vmatpush1.bf16.msra.mxu0 %v557
    %580 = vmatprep.subr.bf16.mxu0 0
    %581 = vmatpush1.bf16.msra.mxu0 %v558
    %582 = vmatprep.subr.bf16.mxu0 0
    %583 = vmatpush1.bf16.msra.mxu0 %v559
    %584 = vmatprep.subr.bf16.mxu0 0
    %585 = vmatpush1.bf16.msra.mxu0 0
    %586 = vmatprep.subr.bf16.mxu0 0
    %587 = vmatpush1.bf16.msra.mxu0 0
    %588 = vmatprep.subr.bf16.mxu0 0
    %589 = vmatpush1.bf16.msra.mxu0 0
    %590 = vmatprep.subr.bf16.mxu0 0
    %591 = vmatpush1.bf16.msra.mxu0 0
    %592 = vmatprep.subr.bf16.mxu0 0
    %593 = vmatpush1.bf16.msra.mxu0 0
    %594 = vmatprep.subr.bf16.mxu0 0
    %595 = vmatpush1.bf16.msra.mxu0 0
    %596 = vmatprep.subr.bf16.mxu0 0
    %597 = vmatpush1.bf16.msra.mxu0 0
    %598 = vmatprep.subr.bf16.mxu0 0
    %599 = vmatpush1.bf16.msra.mxu0 0
    %600 = vmatprep.mubr.bf16.mxu0 0
    %601 = vmatmul.mubr.bf16.gmra.mrb[0].mxu0 %v496
    %v602 = vpop.f32.mrb[0].mxu0
    %v603 = vadd.f32 %v518, %v602
    %v604 = vpop.f32.mrb[0].mxu0
    %v605 = vpop.f32.mrb[0].mxu0
    %v606 = vpop.f32.mrb[0].mxu0
    %607 = vdwg.mxu0
    %v608 = vpack.c.bf16 %v603, %v603
    %v609 = vld [vmem:[#allocation13] sm:$0xf]
    %v610 = vld [vmem:[#allocation13 + $0x4] sm:$0xf]
    %v611 = vld [vmem:[#allocation13 + $0x8] sm:$0xf]
    %v612 = vld [vmem:[#allocation13 + $0xc] sm:$0xf]
    %v613 = vld [vmem:[#allocation13 + $0x10] sm:$0xf]
    %v614 = vld [vmem:[#allocation13 + $0x14] sm:$0xf]
    %v615 = vld [vmem:[#allocation13 + $0x18] sm:$0xf]
    %v616 = vld [vmem:[#allocation13 + $0x1c] sm:$0xf]
    %v617 = vld [vmem:[#allocation13 + $0x20] sm:$0xf]
    %v618 = vld [vmem:[#allocation13 + $0x24] sm:$0xf]
    %v619 = vld [vmem:[#allocation13 + $0x28] sm:$0xf]
    %v620 = vld [vmem:[#allocation13 + $0x2c] sm:$0xf]
    %v621 = vld [vmem:[#allocation13 + $0x30] sm:$0xf]
    %v622 = vld [vmem:[#allocation13 + $0x34] sm:$0xf]
    %v623 = vld [vmem:[#allocation13 + $0x38] sm:$0xf]
    %v624 = vld [vmem:[#allocation13 + $0x3c] sm:$0xf]
    %v625 = vld [vmem:[%s11] sm:$0x1]
    %v627 = vlaneseq
    %v628 = vshrl.u32 %v627, 7
    %v629 = vsub.s32 0, %v628
    %v630 = vrot.slane %v625, %v629
    %v648 = vunpack.c.l.b16 %v609
    %v649 = vunpack.c.l.b16 %v610
    %v650 = vunpack.c.l.b16 %v611
    %v651 = vunpack.c.l.b16 %v612
    %v652 = vunpack.c.l.b16 %v613
    %v653 = vunpack.c.l.b16 %v614
    %v654 = vunpack.c.l.b16 %v615
    %v655 = vunpack.c.l.b16 %v616
    %v656 = vunpack.c.l.b16 %v617
    %v657 = vunpack.c.l.b16 %v618
    %v658 = vunpack.c.l.b16 %v619
    %v659 = vunpack.c.l.b16 %v620
    %v660 = vunpack.c.l.b16 %v621
    %v661 = vunpack.c.l.b16 %v622
    %v662 = vunpack.c.l.b16 %v623
    %v663 = vunpack.c.l.b16 %v624
    %v664 = vpack.c.b16 %v649, %v648
    %v665 = vpack.c.b16 %v651, %v650
    %v666 = vpack.c.b16 %v653, %v652
    %v667 = vpack.c.b16 %v655, %v654
    %v668 = vpack.c.b16 %v657, %v656
    %v669 = vpack.c.b16 %v659, %v658
    %v670 = vpack.c.b16 %v661, %v660
    %v671 = vpack.c.b16 %v663, %v662
    %680 = vmatprep.subr.bf16.mxu0 0
    %681 = vmatpush1.bf16.msra.mxu0 %v664
    %682 = vmatprep.subr.bf16.mxu0 0
    %683 = vmatpush1.bf16.msra.mxu0 %v665
    %684 = vmatprep.subr.bf16.mxu0 0
    %685 = vmatpush1.bf16.msra.mxu0 %v666
    %686 = vmatprep.subr.bf16.mxu0 0
    %687 = vmatpush1.bf16.msra.mxu0 %v667
    %688 = vmatprep.subr.bf16.mxu0 0
    %689 = vmatpush1.bf16.msra.mxu0 %v668
    %690 = vmatprep.subr.bf16.mxu0 0
    %691 = vmatpush1.bf16.msra.mxu0 %v669
    %692 = vmatprep.subr.bf16.mxu0 0
    %693 = vmatpush1.bf16.msra.mxu0 %v670
    %694 = vmatprep.subr.bf16.mxu0 0
    %695 = vmatpush1.bf16.msra.mxu0 %v671
    %696 = vmatprep.subr.bf16.mxu0 0
    %697 = vmatpush1.bf16.msra.mxu0 0
    %698 = vmatprep.subr.bf16.mxu0 0
    %699 = vmatpush1.bf16.msra.mxu0 0
    %700 = vmatprep.subr.bf16.mxu0 0
    %701 = vmatpush1.bf16.msra.mxu0 0
    %702 = vmatprep.subr.bf16.mxu0 0
    %703 = vmatpush1.bf16.msra.mxu0 0
    %704 = vmatprep.subr.bf16.mxu0 0
    %705 = vmatpush1.bf16.msra.mxu0 0
    %706 = vmatprep.subr.bf16.mxu0 0
    %707 = vmatpush1.bf16.msra.mxu0 0
    %708 = vmatprep.subr.bf16.mxu0 0
    %709 = vmatpush1.bf16.msra.mxu0 0
    %710 = vmatprep.subr.bf16.mxu0 0
    %711 = vmatpush1.bf16.msra.mxu0 0
    %712 = vmatprep.mubr.bf16.mxu0 0
    %713 = vmatmul.mubr.bf16.gmra.mrb[0].mxu0 %v608
    %v714 = vpop.f32.mrb[0].mxu0
    %v715 = vadd.f32 %v630, %v714
    %v716 = vpop.f32.mrb[0].mxu0
    %v717 = vpop.f32.mrb[0].mxu0
    %v718 = vpop.f32.mrb[0].mxu0
    %719 = vdwg.mxu0
    %v720 = vmax.f32 %v715, 0.0
    %v721 = vpack.c.bf16 %v720, %v720
    %v722 = vld [vmem:[#allocation14] sm:$0xf]
    %v723 = vld [vmem:[#allocation14 + $0x4] sm:$0xf]
    %v724 = vld [vmem:[#allocation14 + $0x8] sm:$0xf]
    %v725 = vld [vmem:[#allocation14 + $0xc] sm:$0xf]
    %v726 = vld [vmem:[#allocation14 + $0x10] sm:$0xf]
    %v727 = vld [vmem:[#allocation14 + $0x14] sm:$0xf]
    %v728 = vld [vmem:[#allocation14 + $0x18] sm:$0xf]
    %v729 = vld [vmem:[#allocation14 + $0x1c] sm:$0xf]
    %v730 = vld [vmem:[#allocation14 + $0x20] sm:$0xf]
    %v731 = vld [vmem:[#allocation14 + $0x24] sm:$0xf]
    %v732 = vld [vmem:[#allocation14 + $0x28] sm:$0xf]
    %v733 = vld [vmem:[#allocation14 + $0x2c] sm:$0xf]
    %v734 = vld [vmem:[#allocation14 + $0x30] sm:$0xf]
    %v735 = vld [vmem:[#allocation14 + $0x34] sm:$0xf]
    %v736 = vld [vmem:[#allocation14 + $0x38] sm:$0xf]
    %v737 = vld [vmem:[#allocation14 + $0x3c] sm:$0xf]
    %v738 = vld [vmem:[%s13] sm:$0x1]
    %v740 = vlaneseq
    %v741 = vshrl.u32 %v740, 7
    %v742 = vsub.s32 0, %v741
    %v743 = vrot.slane %v738, %v742
    %v761 = vunpack.c.l.b16 %v722
    %v762 = vunpack.c.l.b16 %v723
    %v763 = vunpack.c.l.b16 %v724
    %v764 = vunpack.c.l.b16 %v725
    %v765 = vunpack.c.l.b16 %v726
    %v766 = vunpack.c.l.b16 %v727
    %v767 = vunpack.c.l.b16 %v728
    %v768 = vunpack.c.l.b16 %v729
    %v769 = vunpack.c.l.b16 %v730
    %v770 = vunpack.c.l.b16 %v731
    %v771 = vunpack.c.l.b16 %v732
    %v772 = vunpack.c.l.b16 %v733
    %v773 = vunpack.c.l.b16 %v734
    %v774 = vunpack.c.l.b16 %v735
    %v775 = vunpack.c.l.b16 %v736
    %v776 = vunpack.c.l.b16 %v737
    %v777 = vpack.c.b16 %v762, %v761
    %v778 = vpack.c.b16 %v764, %v763
    %v779 = vpack.c.b16 %v766, %v765
    %v780 = vpack.c.b16 %v768, %v767
    %v781 = vpack.c.b16 %v770, %v769
    %v782 = vpack.c.b16 %v772, %v771
    %v783 = vpack.c.b16 %v774, %v773
    %v784 = vpack.c.b16 %v776, %v775
    %793 = vmatprep.subr.bf16.mxu0 0
    %794 = vmatpush1.bf16.msra.mxu0 %v777
    %795 = vmatprep.subr.bf16.mxu0 0
    %796 = vmatpush1.bf16.msra.mxu0 %v778
    %797 = vmatprep.subr.bf16.mxu0 0
    %798 = vmatpush1.bf16.msra.mxu0 %v779
    %799 = vmatprep.subr.bf16.mxu0 0
    %800 = vmatpush1.bf16.msra.mxu0 %v780
    %801 = vmatprep.subr.bf16.mxu0 0
    %802 = vmatpush1.bf16.msra.mxu0 %v781
    %803 = vmatprep.subr.bf16.mxu0 0
    %804 = vmatpush1.bf16.msra.mxu0 %v782
    %805 = vmatprep.subr.bf16.mxu0 0
    %806 = vmatpush1.bf16.msra.mxu0 %v783
    %807 = vmatprep.subr.bf16.mxu0 0
    %808 = vmatpush1.bf16.msra.mxu0 %v784
    %809 = vmatprep.subr.bf16.mxu0 0
    %810 = vmatpush1.bf16.msra.mxu0 0
    %811 = vmatprep.subr.bf16.mxu0 0
    %812 = vmatpush1.bf16.msra.mxu0 0
    %813 = vmatprep.subr.bf16.mxu0 0
    %814 = vmatpush1.bf16.msra.mxu0 0
    %815 = vmatprep.subr.bf16.mxu0 0
    %816 = vmatpush1.bf16.msra.mxu0 0
    %817 = vmatprep.subr.bf16.mxu0 0
    %818 = vmatpush1.bf16.msra.mxu0 0
    %819 = vmatprep.subr.bf16.mxu0 0
    %820 = vmatpush1.bf16.msra.mxu0 0
    %821 = vmatprep.subr.bf16.mxu0 0
    %822 = vmatpush1.bf16.msra.mxu0 0
    %823 = vmatprep.subr.bf16.mxu0 0
    %824 = vmatpush1.bf16.msra.mxu0 0
    %825 = vmatprep.mubr.bf16.mxu0 0
    %826 = vmatmul.mubr.bf16.gmra.mrb[0].mxu0 %v721
    %v827 = vpop.f32.mrb[0].mxu0
    %v828 = vadd.f32 %v743, %v827
    %v829 = vpop.f32.mrb[0].mxu0
    %v830 = vpop.f32.mrb[0].mxu0
    %v831 = vpop.f32.mrb[0].mxu0
    %832 = vdwg.mxu0
    %833 = vst [vmem:[#allocation17] sm:$0xff] %v828
    // Predicated region
    $region90: #{tpu_custom_call.1} parent=1 // pred_check
      _
    $region91: #{tpu_custom_call.1} parent=1 // pred_check_branch
      %835 = sbr.rel (0) target = $region93
    $region92: #{tpu_custom_call.1} parent=1 // pred_region
      %s837 = ssub.s32 128, 128
      %838 = vsyncadd [#allocation4], %s837
      %s840 = sshll.u32 [#allocation16], 4
      %s841 = int_to_ptr.vmem [resolvable:$true] %s840
      %843 = dma.vmem_to_hbm [thread:$0]  %s841, 128, %s14, [#allocation4]
    $region93: #{tpu_custom_call.1} parent=1 // pred_fallthru
      _
    // Predicated region
    $region94: #{tpu_custom_call.1} parent=1 // pred_check
      _
    $region95: #{tpu_custom_call.1} parent=1 // pred_check_branch
      %845 = sbr.rel (0) target = $region97
    $region96: #{tpu_custom_call.1} parent=1 // pred_region
      %s847 = ssub.s32 128, 128
      %848 = vsyncadd [#allocation18], %s847
      %s850 = sshll.u32 [#allocation17], 4
      %s851 = int_to_ptr.vmem [resolvable:$true] %s850
      %853 = dma.vmem_to_hbm [thread:$0]  %s851, 128, %s15, [#allocation18]
    $region97: #{tpu_custom_call.1} parent=1 // pred_fallthru
      _
    // Predicated region
    $region98: #{tpu_custom_call.1} parent=1 // pred_check
      _
    $region99: #{tpu_custom_call.1} parent=1 // pred_check_branch
      %855 = sbr.rel (0) target = $region101
    $region100: #{tpu_custom_call.1} parent=1 // pred_region
      %856 = dma.done [#allocation4], 128
    $region101: #{tpu_custom_call.1} parent=1 // pred_fallthru
      _
    // Predicated region
    $region102: #{tpu_custom_call.1} parent=1 // pred_check
      _
    $region103: #{tpu_custom_call.1} parent=1 // pred_check_branch
      %858 = sbr.rel (0) target = $region105
    $region104: #{tpu_custom_call.1} parent=1 // pred_region
      %859 = dma.done [#allocation18], 128
    $region105: #{tpu_custom_call.1} parent=1 // pred_fallthru
      _
    %860 = vsyncpa [#allocation3], 1
    %861 = vsyncpa [#allocation6], 1
    %862 = vsyncpa [#allocation9], 1
    %863 = vsyncpa [#allocation12], 1
    %864 = vsyncpa [#allocation15], 1
    %865 = vsyncpa [#allocation4], 1
    %866 = vsyncpa [#allocation18], 1

</llo_original>
